<compile_context>
chip_gen: v5e
topology: v5e:2x2
jax: 0.10.0
libtpu: 0.0.40
codegen_flags: <defaults>
</compile_context>

<pallas_src>
import functools

import jax
import jax.numpy as jnp
from jax.experimental import pallas as pl
from jax.experimental.pallas import tpu as pltpu

LANE = 128


def _round_up(x, m):
    return (x + m - 1) // m * m


def critic_kernel(s_ref, a_ref, w1_ref, b1_ref, w2s_ref, w2a_ref, b2_ref,
                  w3_ref, b3_ref, o_ref):
    # fc1 + ReLU
    xs = jnp.dot(s_ref[...], w1_ref[...],
                 preferred_element_type=jnp.float32) + b1_ref[...]
    xs = jnp.maximum(xs, 0.0)
    # fc2 on cat([xs, action]) == xs @ W2s + action @ W2a  (no lane concat)
    h = (jnp.dot(xs, w2s_ref[...], preferred_element_type=jnp.float32)
         + jnp.dot(a_ref[...], w2a_ref[...], preferred_element_type=jnp.float32)
         + b2_ref[...])
    h = jnp.maximum(h, 0.0)
    # fc3 (output padded to 128 lanes -> lane-dense store; col 0 is the Q-value)
    o_ref[...] = jnp.dot(h, w3_ref[...],
                         preferred_element_type=jnp.float32) + b3_ref[...]


def prepare_critic_params(w1, b1, w2, b2, w3, b3):
    """One-time conversion from PyTorch (out, in) layout to kernel layout."""
    h1 = w1.shape[0]
    h2 = w2.shape[0]
    w1t = jnp.asarray(w1, jnp.float32).T                     # (state, h1)
    w2t = jnp.asarray(w2, jnp.float32).T                     # (h1+act, h2)
    w2s = w2t[:h1]                                           # (h1, h2)
    w2a = w2t[h1:]                                           # (act, h2)
    w3t = jnp.asarray(w3, jnp.float32).T                     # (h2, 1)
    w3p = jnp.zeros((h2, LANE), jnp.float32).at[:, :1].set(w3t)
    b1r = jnp.asarray(b1, jnp.float32)[None, :]              # (1, h1)
    b2r = jnp.asarray(b2, jnp.float32)[None, :]              # (1, h2)
    b3p = jnp.zeros((1, LANE), jnp.float32).at[:, :1].set(
        jnp.asarray(b3, jnp.float32)[None, :])
    return (w1t, b1r, w2s, w2a, b2r, w3p, b3p)


@functools.partial(jax.jit, static_argnames=("tile_b",))
def critic_forward(state, action, params, tile_b=512):
    """state: (B, state_size), action: (B, action_size) -> (B, 1) Q-values."""
    w1t, b1r, w2s, w2a, b2r, w3p, b3p = params
    B, S = state.shape
    A = action.shape[1]

    tb = min(tile_b, _round_up(B, 8))       # batch tile, multiple of 8
    Bp = _round_up(B, tb)
    if Bp != B:
        state = jnp.pad(state, ((0, Bp - B), (0, 0)))
        action = jnp.pad(action, ((0, Bp - B), (0, 0)))

    def full(arr):
        n = arr.ndim
        return pl.BlockSpec(arr.shape, lambda i, _n=n: (0,) * _n)

    def rows(ncols):
        return pl.BlockSpec((tb, ncols), lambda i: (i, 0))

    out = pl.pallas_call(
        critic_kernel,
        out_shape=jax.ShapeDtypeStruct((Bp, LANE), jnp.float32),
        grid=(Bp // tb,),
        in_specs=[rows(S), rows(A),
                  full(w1t), full(b1r), full(w2s), full(w2a), full(b2r),
                  full(w3p), full(b3p)],
        out_specs=rows(LANE),
        compiler_params=pltpu.CompilerParams(
            dimension_semantics=("parallel",)),
    )(state, action, w1t, b1r, w2s, w2a, b2r, w3p, b3p)
    return out[:B, :1]


def init_critic_params(key, state_size, action_size, hidden_layers):
    """Deterministic init mirroring the PyTorch module.

    PyTorch quirk preserved: hidden_init uses weight.size()[0] == out_features
    as the 'fan_in', so lim = 1/sqrt(out_features) for fc1/fc2 weights.
    Biases keep the default nn.Linear init: U(-1/sqrt(in_features), ...).
    """
    h1, h2 = hidden_layers
    ks = jax.random.split(key, 6)

    def u(k, shape, lim):
        return jax.random.uniform(k, shape, jnp.float32, -lim, lim)

    w1 = u(ks[0], (h1, state_size), 1.0 / float(h1) ** 0.5)
    b1 = u(ks[1], (h1,), 1.0 / float(state_size) ** 0.5)
    w2 = u(ks[2], (h2, h1 + action_size), 1.0 / float(h2) ** 0.5)
    b2 = u(ks[3], (h2,), 1.0 / float(h1 + action_size) ** 0.5)
    w3 = u(ks[4], (1, h2), 0.003)
    b3 = u(ks[5], (1,), 1.0 / float(h2) ** 0.5)
    return w1, b1, w2, b2, w3, b3


if __name__ == "__main__":
    key = jax.random.PRNGKey(0)
    state_size, action_size = 8, 4
    hidden_layers = (32, 32)
    batch = 2

    pkey, skey, akey = jax.random.split(key, 3)
    w1, b1, w2, b2, w3, b3 = init_critic_params(
        pkey, state_size, action_size, hidden_layers)
    state = jax.random.normal(skey, (batch, state_size), jnp.float32)
    action = jax.random.normal(akey, (batch, action_size), jnp.float32)

    # One-time param layout conversion (kept out of the per-step hot path).
    params = prepare_critic_params(w1, b1, w2, b2, w3, b3)

    q = critic_forward(state, action, params)
    jax.block_until_ready(q)

    # Cross-check against a plain-JAX reference of the PyTorch forward pass.
    xs = jnp.maximum(state @ w1.T + b1, 0.0)
    x = jnp.concatenate([xs, action], axis=1)
    h = jnp.maximum(x @ w2.T + b2, 0.0)
    ref = h @ w3.T + b3

    assert q.shape == (batch, 1)
    assert jnp.allclose(q, ref, atol=1e-5, rtol=1e-5)
    print("KERNEL_OK")
</pallas_src>

<mosaic_0001>
module attributes {stable_mosaic.version = 11 : i64} {
  func.func @critic_kernel(%arg0: i32, %arg1: memref<8x8xf32, #tpu.memory_space<vmem>>, %arg2: memref<8x4xf32, #tpu.memory_space<vmem>>, %arg3: memref<8x32xf32, #tpu.memory_space<vmem>>, %arg4: memref<1x32xf32, #tpu.memory_space<vmem>>, %arg5: memref<32x32xf32, #tpu.memory_space<vmem>>, %arg6: memref<4x32xf32, #tpu.memory_space<vmem>>, %arg7: memref<1x32xf32, #tpu.memory_space<vmem>>, %arg8: memref<32x128xf32, #tpu.memory_space<vmem>>, %arg9: memref<1x128xf32, #tpu.memory_space<vmem>>, %arg10: memref<8x128xf32, #tpu.memory_space<vmem>>) attributes {dimension_semantics = [#tpu.dimension_semantics<parallel>], iteration_bounds = array<i64: 1>, scalar_prefetch = 0 : i64, scratch_operands = 0 : i64, tpu.core_type = #tpu.core_type<tc>, window_params = [{transform_indices = @transform_0, window_bounds = array<i64: 8, 8>}, {transform_indices = @transform_1, window_bounds = array<i64: 8, 4>}, {pipeline_mode = #tpu.pipeline_mode<synchronous>, transform_indices = @transform_2, window_bounds = array<i64: 8, 32>}, {pipeline_mode = #tpu.pipeline_mode<synchronous>, transform_indices = @transform_3, window_bounds = array<i64: 1, 32>}, {pipeline_mode = #tpu.pipeline_mode<synchronous>, transform_indices = @transform_4, window_bounds = array<i64: 32, 32>}, {pipeline_mode = #tpu.pipeline_mode<synchronous>, transform_indices = @transform_5, window_bounds = array<i64: 4, 32>}, {pipeline_mode = #tpu.pipeline_mode<synchronous>, transform_indices = @transform_6, window_bounds = array<i64: 1, 32>}, {pipeline_mode = #tpu.pipeline_mode<synchronous>, transform_indices = @transform_7, window_bounds = array<i64: 32, 128>}, {pipeline_mode = #tpu.pipeline_mode<synchronous>, transform_indices = @transform_8, window_bounds = array<i64: 1, 128>}, {transform_indices = @transform_9, window_bounds = array<i64: 8, 128>}]} {
    %c0 = arith.constant 0 : index
    %c0_0 = arith.constant 0 : index
    %0 = vector.load %arg1[%c0, %c0_0] : memref<8x8xf32, #tpu.memory_space<vmem>>, vector<8x8xf32>
    %c0_1 = arith.constant 0 : index
    %c0_2 = arith.constant 0 : index
    %1 = vector.load %arg3[%c0_1, %c0_2] : memref<8x32xf32, #tpu.memory_space<vmem>>, vector<8x32xf32>
    %cst = arith.constant dense<0.000000e+00> : vector<8x32xf32>
    %2 = tpu.matmul %0, %1, %cst {dimension_numbers = #tpu.dot_dimension_numbers<[1], [0], [0], [1], [0, 0, 1, 1], [], []>} : vector<8x8xf32>, vector<8x32xf32>, vector<8x32xf32> -> vector<8x32xf32>
    %c0_3 = arith.constant 0 : index
    %c0_4 = arith.constant 0 : index
    %3 = vector.load %arg4[%c0_3, %c0_4] : memref<1x32xf32, #tpu.memory_space<vmem>>, vector<1x32xf32>
    %4 = vector.broadcast %3 : vector<1x32xf32> to vector<8x32xf32>
    %5 = arith.addf %2, %4 : vector<8x32xf32>
    %cst_5 = arith.constant 0.000000e+00 : f32
    %6 = vector.broadcast %cst_5 : f32 to vector<8x32xf32>
    %7 = arith.maximumf %5, %6 : vector<8x32xf32>
    %c0_6 = arith.constant 0 : index
    %c0_7 = arith.constant 0 : index
    %8 = vector.load %arg5[%c0_6, %c0_7] : memref<32x32xf32, #tpu.memory_space<vmem>>, vector<32x32xf32>
    %cst_8 = arith.constant dense<0.000000e+00> : vector<8x32xf32>
    %9 = tpu.matmul %7, %8, %cst_8 {dimension_numbers = #tpu.dot_dimension_numbers<[1], [0], [0], [1], [0, 0, 1, 1], [], []>} : vector<8x32xf32>, vector<32x32xf32>, vector<8x32xf32> -> vector<8x32xf32>
    %c0_9 = arith.constant 0 : index
    %c0_10 = arith.constant 0 : index
    %10 = vector.load %arg2[%c0_9, %c0_10] : memref<8x4xf32, #tpu.memory_space<vmem>>, vector<8x4xf32>
    %c0_11 = arith.constant 0 : index
    %c0_12 = arith.constant 0 : index
    %11 = vector.load %arg6[%c0_11, %c0_12] : memref<4x32xf32, #tpu.memory_space<vmem>>, vector<4x32xf32>
    %cst_13 = arith.constant dense<0.000000e+00> : vector<8x32xf32>
    %12 = tpu.matmul %10, %11, %cst_13 {dimension_numbers = #tpu.dot_dimension_numbers<[1], [0], [0], [1], [0, 0, 1, 1], [], []>} : vector<8x4xf32>, vector<4x32xf32>, vector<8x32xf32> -> vector<8x32xf32>
    %13 = arith.addf %9, %12 : vector<8x32xf32>
    %c0_14 = arith.constant 0 : index
    %c0_15 = arith.constant 0 : index
    %14 = vector.load %arg7[%c0_14, %c0_15] : memref<1x32xf32, #tpu.memory_space<vmem>>, vector<1x32xf32>
    %15 = vector.broadcast %14 : vector<1x32xf32> to vector<8x32xf32>
    %16 = arith.addf %13, %15 : vector<8x32xf32>
    %cst_16 = arith.constant 0.000000e+00 : f32
    %17 = vector.broadcast %cst_16 : f32 to vector<8x32xf32>
    %18 = arith.maximumf %16, %17 : vector<8x32xf32>
    %c0_17 = arith.constant 0 : index
    %c0_18 = arith.constant 0 : index
    %19 = vector.load %arg8[%c0_17, %c0_18] : memref<32x128xf32, #tpu.memory_space<vmem>>, vector<32x128xf32>
    %cst_19 = arith.constant dense<0.000000e+00> : vector<8x128xf32>
    %20 = tpu.matmul %18, %19, %cst_19 {dimension_numbers = #tpu.dot_dimension_numbers<[1], [0], [0], [1], [0, 0, 1, 1], [], []>} : vector<8x32xf32>, vector<32x128xf32>, vector<8x128xf32> -> vector<8x128xf32>
    %c0_20 = arith.constant 0 : index
    %c0_21 = arith.constant 0 : index
    %21 = vector.load %arg9[%c0_20, %c0_21] : memref<1x128xf32, #tpu.memory_space<vmem>>, vector<1x128xf32>
    %22 = vector.broadcast %21 : vector<1x128xf32> to vector<8x128xf32>
    %23 = arith.addf %20, %22 : vector<8x128xf32>
    %c0_22 = arith.constant 0 : index
    %c0_23 = arith.constant 0 : index
    %24 = vector.load %arg10[%c0_22, %c0_23] : memref<8x128xf32, #tpu.memory_space<vmem>>, vector<8x128xf32>
    tpu.vector_store %arg10[%c0_22, %c0_23], %23 {strides = array<i32>} : memref<8x128xf32, #tpu.memory_space<vmem>>, vector<8x128xf32>,
    return
  }
  func.func @transform_0(%arg0: i32) -> (i32, i32) {
    %c0_i32 = arith.constant 0 : i32
    %c0_i32_0 = arith.constant 0 : i32
    return %arg0, %c0_i32 : i32, i32
  }
  func.func @transform_1(%arg0: i32) -> (i32, i32) {
    %c0_i32 = arith.constant 0 : i32
    %c0_i32_0 = arith.constant 0 : i32
    return %arg0, %c0_i32 : i32, i32
  }
  func.func @transform_2(%arg0: i32) -> (i32, i32) {
    %c0_i32 = arith.constant 0 : i32
    %c0_i32_0 = arith.constant 0 : i32
    %c0_i32_1 = arith.constant 0 : i32
    return %c0_i32, %c0_i32_0 : i32, i32
  }
  func.func @transform_3(%arg0: i32) -> (i32, i32) {
    %c0_i32 = arith.constant 0 : i32
    %c0_i32_0 = arith.constant 0 : i32
    %c0_i32_1 = arith.constant 0 : i32
    return %c0_i32, %c0_i32_0 : i32, i32
  }
  func.func @transform_4(%arg0: i32) -> (i32, i32) {
    %c0_i32 = arith.constant 0 : i32
    %c0_i32_0 = arith.constant 0 : i32
    %c0_i32_1 = arith.constant 0 : i32
    return %c0_i32, %c0_i32_0 : i32, i32
  }
  func.func @transform_5(%arg0: i32) -> (i32, i32) {
    %c0_i32 = arith.constant 0 : i32
    %c0_i32_0 = arith.constant 0 : i32
    %c0_i32_1 = arith.constant 0 : i32
    return %c0_i32, %c0_i32_0 : i32, i32
  }
  func.func @transform_6(%arg0: i32) -> (i32, i32) {
    %c0_i32 = arith.constant 0 : i32
    %c0_i32_0 = arith.constant 0 : i32
    %c0_i32_1 = arith.constant 0 : i32
    return %c0_i32, %c0_i32_0 : i32, i32
  }
  func.func @transform_7(%arg0: i32) -> (i32, i32) {
    %c0_i32 = arith.constant 0 : i32
    %c0_i32_0 = arith.constant 0 : i32
    %c0_i32_1 = arith.constant 0 : i32
    return %c0_i32, %c0_i32_0 : i32, i32
  }
  func.func @transform_8(%arg0: i32) -> (i32, i32) {
    %c0_i32 = arith.constant 0 : i32
    %c0_i32_0 = arith.constant 0 : i32
    %c0_i32_1 = arith.constant 0 : i32
    return %c0_i32, %c0_i32_0 : i32, i32
  }
  func.func @transform_9(%arg0: i32) -> (i32, i32) {
    %c0_i32 = arith.constant 0 : i32
    %c0_i32_0 = arith.constant 0 : i32
    return %arg0, %c0_i32 : i32, i32
  }
}

</mosaic_0001>

<llo_original>
// kernel: critic_forward.1
$region0: #{critic_forward.1}
  #allocation0 [shape = 'u32[]', space=smem, size = 0x4, offset = 0x4, fixed_abs, tag = 'smem constant byte address 0x4 - core index']
  #allocation1 [shape = 'u32[72,128]{1,0:T(1,128)}', space=vmem, size = 0x9000, scoped, tag = 'internal scratch']
  %s0 = inlined_call_operand.vmem [shape: f32[8,8], index: 0, kind: input, shape index: {}]
  %s1 = inlined_call_operand.vmem [shape: f32[8,4], index: 1, kind: input, shape index: {}]
  %s2 = inlined_call_operand.vmem [shape: f32[8,32], index: 2, kind: input, shape index: {}]
  %s3 = inlined_call_operand.vmem [shape: f32[1,32], index: 3, kind: input, shape index: {}]
  %s4 = inlined_call_operand.hbm [shape: f32[32,32], index: 4, kind: input, shape index: {}]
  %s5 = inlined_call_operand.vmem [shape: f32[4,32], index: 5, kind: input, shape index: {}]
  %s6 = inlined_call_operand.vmem [shape: f32[1,32], index: 6, kind: input, shape index: {}]
  %s7 = inlined_call_operand.hbm [shape: f32[32,128], index: 7, kind: input, shape index: {}]
  %s8 = inlined_call_operand.vmem [shape: f32[1,128], index: 8, kind: input, shape index: {}]
  %s9 = inlined_call_operand.vmem [shape: f32[8,128], index: 9, kind: output, shape index: {}]
  %s10 = sld [smem:[#allocation0]]
  $region54: #{critic_forward.1} parent=0
    _
  %s12 = ssub.s32 1, %s10
  %s13 = scalar_select 0, %s12, %s10
  $region1: #{critic_forward.1} parent=0
    #allocation2 [shape = 'u8[16384]{0}', space=vmem, size = 0x4000, scoped, tag = 'input window, operand 4, single buffered']
    #allocation3 [shape = 's32[1]{0}', space=sflag, size = 0x4, scoped, tag = 'scoped memory for critic_forward.1']
    #allocation4 [shape = 'u8[16384]{0}', space=vmem, size = 0x4000, scoped, tag = 'input window, operand 7, single buffered']
    #allocation5 [shape = 's32[1]{0}', space=sflag, size = 0x4, scoped, tag = 'scoped memory for critic_forward.1']
    %14 = vsyncpa [#allocation3], 0
    %15 = vsyncpa [#allocation5], 0
    // Predicated region
    $region2: #{critic_forward.1} parent=1 // pred_check
      _
    $region3: #{critic_forward.1} parent=1 // pred_check_branch
      %17 = sbr.rel (0) target = $region5
    $region4: #{critic_forward.1} parent=1 // pred_region
      _
    $region5: #{critic_forward.1} parent=1 // pred_fallthru
      _
    // Predicated region
    $region6: #{critic_forward.1} parent=1 // pred_check
      _
    $region7: #{critic_forward.1} parent=1 // pred_check_branch
      %19 = sbr.rel (0) target = $region9
    $region8: #{critic_forward.1} parent=1 // pred_region
      _
    $region9: #{critic_forward.1} parent=1 // pred_fallthru
      _
    // Predicated region
    $region10: #{critic_forward.1} parent=1 // pred_check
      _
    $region11: #{critic_forward.1} parent=1 // pred_check_branch
      %21 = sbr.rel (0) target = $region13
    $region12: #{critic_forward.1} parent=1 // pred_region
      _
    $region13: #{critic_forward.1} parent=1 // pred_fallthru
      _
    // Predicated region
    $region14: #{critic_forward.1} parent=1 // pred_check
      _
    $region15: #{critic_forward.1} parent=1 // pred_check_branch
      %23 = sbr.rel (0) target = $region17
    $region16: #{critic_forward.1} parent=1 // pred_region
      _
    $region17: #{critic_forward.1} parent=1 // pred_fallthru
      _
    // Predicated region
    $region18: #{critic_forward.1} parent=1 // pred_check
      _
    $region19: #{critic_forward.1} parent=1 // pred_check_branch
      %25 = sbr.rel (0) target = $region21
    $region20: #{critic_forward.1} parent=1 // pred_region
      %27 = vsyncadd [#allocation3], 0
      %s28 = sshll.u32 %s4, 4
      %s29 = int_to_ptr.hbm [resolvable:$true] %s28
      %s30 = sshll.u32 [#allocation2], 4
      %s31 = int_to_ptr.vmem [resolvable:$true] %s30
      %36 = dma.hbm_to_vmem [thread:$0]  %s29, 512, %s31, [#allocation3], 128, 128, 8
    $region21: #{critic_forward.1} parent=1 // pred_fallthru
      _
    // Predicated region
    $region22: #{critic_forward.1} parent=1 // pred_check
      _
    $region23: #{critic_forward.1} parent=1 // pred_check_branch
      %38 = sbr.rel (0) target = $region25
    $region24: #{critic_forward.1} parent=1 // pred_region
      _
    $region25: #{critic_forward.1} parent=1 // pred_fallthru
      _
    // Predicated region
    $region26: #{critic_forward.1} parent=1 // pred_check
      _
    $region27: #{critic_forward.1} parent=1 // pred_check_branch
      %40 = sbr.rel (0) target = $region29
    $region28: #{critic_forward.1} parent=1 // pred_region
      _
    $region29: #{critic_forward.1} parent=1 // pred_fallthru
      _
    // Predicated region
    $region30: #{critic_forward.1} parent=1 // pred_check
      _
    $region31: #{critic_forward.1} parent=1 // pred_check_branch
      %42 = sbr.rel (0) target = $region33
    $region32: #{critic_forward.1} parent=1 // pred_region
      %44 = vsyncadd [#allocation5], 0
      %s45 = sshll.u32 %s7, 4
      %s46 = int_to_ptr.hbm [resolvable:$true] %s45
      %s47 = sshll.u32 [#allocation4], 4
      %s48 = int_to_ptr.vmem [resolvable:$true] %s47
      %53 = dma.hbm_to_vmem [thread:$0]  %s46, 512, %s48, [#allocation5], 128, 128, 8
    $region33: #{critic_forward.1} parent=1 // pred_fallthru
      _
    // Predicated region
    $region34: #{critic_forward.1} parent=1 // pred_check
      _
    $region35: #{critic_forward.1} parent=1 // pred_check_branch
      %55 = sbr.rel (0) target = $region37
    $region36: #{critic_forward.1} parent=1 // pred_region
      _
    $region37: #{critic_forward.1} parent=1 // pred_fallthru
      _
    // Predicated region
    $region38: #{critic_forward.1} parent=1 // pred_check
      _
    $region39: #{critic_forward.1} parent=1 // pred_check_branch
      %57 = sbr.rel (0) target = $region41
    $region40: #{critic_forward.1} parent=1 // pred_region
      %59 = dma.done [#allocation3], 512
    $region41: #{critic_forward.1} parent=1 // pred_fallthru
      _
    // Predicated region
    $region42: #{critic_forward.1} parent=1 // pred_check
      _
    $region43: #{critic_forward.1} parent=1 // pred_check_branch
      %61 = sbr.rel (0) target = $region45
    $region44: #{critic_forward.1} parent=1 // pred_region
      %63 = dma.done [#allocation5], 512
    $region45: #{critic_forward.1} parent=1 // pred_fallthru
      _
    %v64 = vld [vmem:[%s0] sm:$0xff]
    %v65 = vld [vmem:[%s2] sm:$0xff]
    %v66 = vld [vmem:[%s3] sm:$0x1]
    %v68 = vperm.slane %v66, 0
    %vm70 = vcmask 64512
    %v72 = vsel %vm70, %v64, 0
    %74 = vmatpush.msra.mxu0 0.0
    %75 = vmatpush.msra.mxu0 0.0
    %76 = vmatpush.msra.mxu0 0.0
    %77 = vmatpush.msra.mxu0 0.0
    %78 = vmatpush.msra.mxu0 0.0
    %79 = vmatpush.msra.mxu0 0.0
    %80 = vmatpush.msra.mxu0 0.0
    %81 = vmatpush.msra.mxu0 0.0
    %82 = vmatpush.msra.mxu0 0.0
    %83 = vmatpush.msra.mxu0 0.0
    %84 = vmatpush.msra.mxu0 0.0
    %85 = vmatpush.msra.mxu0 0.0
    %86 = vmatpush.msra.mxu0 0.0
    %87 = vmatpush.msra.mxu0 0.0
    %88 = vmatpush.msra.mxu0 0.0
    %89 = vmatpush.msra.mxu0 %v65
    %90 = vmatmul.f32.gmra.mxu0 %v72
    %v91 = vpop.f32.mrf.mxu0
    %v92 = vadd.f32 %v68, %v91
    %93 = vdwg.mxu0
    %v94 = vmax.f32 %v92, 0.0
    %v95 = vld [vmem:[#allocation2] sm:$0xff]
    %v96 = vld [vmem:[#allocation2 + $0x8] sm:$0xff]
    %v97 = vld [vmem:[#allocation2 + $0x10] sm:$0xff]
    %v98 = vld [vmem:[#allocation2 + $0x18] sm:$0xff]
    %v99 = vld [vmem:[%s1] sm:$0xff]
    %v100 = vld [vmem:[%s5] sm:$0xf]
    %vm101 = vcmask 31744
    %v103 = vsel %vm101, %v99, 0
    %vm105 = vcmask 1043456
    %v107 = vsel %vm105, %v100, 0
    %109 = vmatpush.msra.mxu0 0.0
    %110 = vmatpush.msra.mxu0 0.0
    %111 = vmatpush.msra.mxu0 0.0
    %112 = vmatpush.msra.mxu0 0.0
    %113 = vmatpush.msra.mxu0 0.0
    %114 = vmatpush.msra.mxu0 0.0
    %115 = vmatpush.msra.mxu0 0.0
    %116 = vmatpush.msra.mxu0 0.0
    %117 = vmatpush.msra.mxu0 0.0
    %118 = vmatpush.msra.mxu0 0.0
    %119 = vmatpush.msra.mxu0 0.0
    %120 = vmatpush.msra.mxu0 0.0
    %121 = vmatpush.msra.mxu0 0.0
    %122 = vmatpush.msra.mxu0 0.0
    %123 = vmatpush.msra.mxu0 0.0
    %124 = vmatpush.msra.mxu0 %v107
    %125 = vmatmul.f32.gmra.mxu0 %v103
    %v126 = vpop.f32.mrf.mxu0
    %v127 = vadd.f32 0.0, %v126
    %128 = vdwg.mxu0
    %vm129 = vcmask 261120
    %v131 = vsel %vm129, %v94, 0
    %133 = vmatpush.msra.mxu0 0.0
    %134 = vmatpush.msra.mxu0 0.0
    %135 = vmatpush.msra.mxu0 0.0
    %136 = vmatpush.msra.mxu0 0.0
    %137 = vmatpush.msra.mxu0 0.0
    %138 = vmatpush.msra.mxu0 0.0
    %139 = vmatpush.msra.mxu0 0.0
    %140 = vmatpush.msra.mxu0 0.0
    %141 = vmatpush.msra.mxu0 0.0
    %142 = vmatpush.msra.mxu0 0.0
    %143 = vmatpush.msra.mxu0 0.0
    %144 = vmatpush.msra.mxu0 0.0
    %145 = vmatpush.msra.mxu0 %v98
    %146 = vmatpush.msra.mxu0 %v97
    %147 = vmatpush.msra.mxu0 %v96
    %148 = vmatpush.msra.mxu0 %v95
    %149 = vmatmul.f32.gmra.mxu0 %v131
    %v150 = vpop.f32.mrf.mxu0
    %v151 = vadd.f32 %v127, %v150
    %152 = vdwg.mxu0
    %v153 = vld [vmem:[%s6] sm:$0x1]
    %v155 = vperm.slane %v153, 0
    %v157 = vadd.f32 %v151, %v155
    %v158 = vmax.f32 %v157, 0.0
    %v159 = vld [vmem:[#allocation4] sm:$0xff]
    %v160 = vld [vmem:[#allocation4 + $0x8] sm:$0xff]
    %v161 = vld [vmem:[#allocation4 + $0x10] sm:$0xff]
    %v162 = vld [vmem:[#allocation4 + $0x18] sm:$0xff]
    %v163 = vld [vmem:[%s8] sm:$0x1]
    %v165 = vperm.slane %v163, 0
    %v168 = vsel %vm129, %v158, 0
    %170 = vmatpush.msra.mxu0 0.0
    %171 = vmatpush.msra.mxu0 0.0
    %172 = vmatpush.msra.mxu0 0.0
    %173 = vmatpush.msra.mxu0 0.0
    %174 = vmatpush.msra.mxu0 0.0
    %175 = vmatpush.msra.mxu0 0.0
    %176 = vmatpush.msra.mxu0 0.0
    %177 = vmatpush.msra.mxu0 0.0
    %178 = vmatpush.msra.mxu0 0.0
    %179 = vmatpush.msra.mxu0 0.0
    %180 = vmatpush.msra.mxu0 0.0
    %181 = vmatpush.msra.mxu0 0.0
    %182 = vmatpush.msra.mxu0 %v162
    %183 = vmatpush.msra.mxu0 %v161
    %184 = vmatpush.msra.mxu0 %v160
    %185 = vmatpush.msra.mxu0 %v159
    %186 = vmatmul.f32.gmra.mxu0 %v168
    %v187 = vpop.f32.mrf.mxu0
    %v188 = vadd.f32 %v165, %v187
    %189 = vdwg.mxu0
    %190 = vst [vmem:[%s9] sm:$0xff] %v188
    // Predicated region
    $region46: #{critic_forward.1} parent=1 // pred_check
      _
    $region47: #{critic_forward.1} parent=1 // pred_check_branch
      %192 = sbr.rel (0) target = $region49
    $region48: #{critic_forward.1} parent=1 // pred_region
      _
    $region49: #{critic_forward.1} parent=1 // pred_fallthru
      _
    // Predicated region
    $region50: #{critic_forward.1} parent=1 // pred_check
      _
    $region51: #{critic_forward.1} parent=1 // pred_check_branch
      %194 = sbr.rel (0) target = $region53
    $region52: #{critic_forward.1} parent=1 // pred_region
      _
    $region53: #{critic_forward.1} parent=1 // pred_fallthru
      _
    %195 = vsyncpa [#allocation3], 1
    %196 = vsyncpa [#allocation5], 1

</llo_original>
